<compile_context>
chip_gen: v5e
topology: v5e:2x2
jax: 0.10.0
libtpu: 0.0.40
codegen_flags: <defaults>
</compile_context>

<pallas_src>
import jax
import jax.numpy as jnp
from jax import lax
from jax.experimental import pallas as pl
from jax.experimental.pallas import tpu as pltpu


# --------------------------------------------------------------------------
# Packed-parameter slab row indices (all rows have length D)
# --------------------------------------------------------------------------
ROW_ATT_I, ROW_ATT_J, ROW_ATT_EM_I, ROW_ATT_EM_J = 0, 1, 2, 3
ROW_G_BIAS, ROW_BN1_S, ROW_BN1_B, ROW_BN2_S, ROW_BN2_B = 4, 5, 6, 7, 8
ROW_W_OUT, ROW_B_OUT = 9, 10
NUM_SLAB_ROWS = 11


# --------------------------------------------------------------------------
# Fused kernel: GraphLayer (lin -> attention -> softmax -> aggregate -> +bias)
#   -> BatchNorm1d + ReLU (GNNLayer)
#   -> * embedding -> BatchNorm1d + ReLU (bn_outlayer_in) -> Dropout(eval)
#   -> OutLayer Linear(D, 1), emitted as one lane-dense (1, TB*N) row per step
# --------------------------------------------------------------------------
def gad_kernel(x_ref, wlin_ref, emb_ref, slab_ref, mask_ref, out_ref, alpha_ref):
    tb, n, f = x_ref.shape
    d = emb_ref.shape[1]

    wlin = wlin_ref[...]                                        # (F, D)
    emb = emb_ref[...]                                          # (N, D)
    mask_add = mask_ref[...]                                    # (N, N): 0 / -1e30

    att_i = slab_ref[ROW_ATT_I:ROW_ATT_I + 1, :]                # (1, D)
    att_j = slab_ref[ROW_ATT_J:ROW_ATT_J + 1, :]
    att_em_i = slab_ref[ROW_ATT_EM_I:ROW_ATT_EM_I + 1, :]
    att_em_j = slab_ref[ROW_ATT_EM_J:ROW_ATT_EM_J + 1, :]
    g_bias = slab_ref[ROW_G_BIAS:ROW_G_BIAS + 1, :]
    bn1_s = slab_ref[ROW_BN1_S:ROW_BN1_S + 1, :]
    bn1_b = slab_ref[ROW_BN1_B:ROW_BN1_B + 1, :]
    bn2_s = slab_ref[ROW_BN2_S:ROW_BN2_S + 1, :]
    bn2_b = slab_ref[ROW_BN2_B:ROW_BN2_B + 1, :]
    w_out = slab_ref[ROW_W_OUT:ROW_W_OUT + 1, :]                # (1, D)
    b_out = slab_ref[ROW_B_OUT:ROW_B_OUT + 1, 0:1]              # (1, 1)

    # Batch folded into the matmul M dimension: one (TB*N, F) x (F, D) MXU pass.
    # (reshape is a free relayout as long as N % 8 == 0)
    x_flat = x_ref[...].astype(jnp.float32).reshape(tb * n, f)
    wx = jnp.dot(x_flat, wlin, preferred_element_type=jnp.float32)        # (TB*N, D)
    wx_bf = wx.astype(jnp.bfloat16)                                       # cast once

    # Batch-invariant embedding contributions to the attention logits.
    a_em_i = jnp.sum(emb * att_em_i, axis=-1, keepdims=True)              # (N, 1)
    a_em_j = lax.dot_general(att_em_j, emb, (((1,), (1,)), ((), ())),
                             preferred_element_type=jnp.float32)          # (1, N)

    # Hoisted i/j logits for the whole batch tile (one VPU pass + one dot).
    a_i_all = jnp.sum(wx * att_i, axis=-1, keepdims=True)                 # (TB*N, 1)
    a_j_all = lax.dot_general(att_j, wx, (((1,), (1,)), ((), ())),
                              preferred_element_type=jnp.float32)         # (1, TB*N)

    # Per-batch-element attention + aggregation (small static unroll, TB <= 8).
    # TODO(synk): switch to lax.fori_loop + VMEM scratch if batch_tile ever grows
    # past ~8 (static unroll does not bound vreg live ranges).
    h_list = []
    for b in range(tb):
        lo = b * n
        # logits: alpha_ij = <att_i, key_i> + <att_j, key_j>, key = (Wx, embedding)
        a_i = a_i_all[lo:lo + n, :] + a_em_i                              # (N, 1)
        a_j = a_j_all[:, lo:lo + n] + a_em_j                              # (1, N)
        s = a_i + a_j                        # (N, N): row = target i, col = source j
        s = jnp.maximum(s, 0.2 * s)          # LeakyReLU(0.2), single VALU op
        s = s + mask_add                     # additive -1e30 mask (topk + self loop)

        # masked softmax over incoming edges; self loop guarantees a finite row max
        m = jnp.max(s, axis=-1, keepdims=True)
        p = jnp.exp(s - m)                   # masked entries underflow to exactly 0
        alpha = p * pl.reciprocal(jnp.sum(p, axis=-1, keepdims=True), approx=True)
        alpha_ref[b] = alpha.astype(alpha_ref.dtype)

        # aggregate messages (heads=1, concat=False); bf16 operands, f32 acc.
        h_list.append(jnp.dot(alpha.astype(jnp.bfloat16), wx_bf[lo:lo + n, :],
                              preferred_element_type=jnp.float32))        # (N, D)

    h_all = jnp.concatenate(h_list, axis=0) if tb > 1 else h_list[0]      # (TB*N, D)
    h_all = h_all + g_bias

    # GNNLayer BatchNorm1d (eval, folded) + ReLU
    h_all = jnp.maximum(h_all * bn1_s + bn1_b, 0.0)

    # out = gcn_out * embedding ; bn_outlayer_in (eval, folded) + ReLU
    emb_tiled = jnp.concatenate([emb] * tb, axis=0) if tb > 1 else emb    # (TB*N, D)
    o = h_all * emb_tiled
    o = jnp.maximum(o * bn2_s + bn2_b, 0.0)

    # Dropout(p=0.2): eval mode -> identity.
    # OutLayer (layer_num=1): one Linear(D, 1) for the whole tile, lane-dense row.
    y = lax.dot_general(w_out, o, (((1,), (1,)), ((), ())),
                        preferred_element_type=jnp.float32) + b_out       # (1, TB*N)
    out_ref[...] = y.reshape(out_ref.shape)


def _pack_params(params):
    d = params["emb"].shape[1]
    rows = [
        params["att_i"].reshape(1, d),
        params["att_j"].reshape(1, d),
        params["att_em_i"].reshape(1, d),
        params["att_em_j"].reshape(1, d),
        params["g_bias"].reshape(1, d),
        params["bn1_scale"].reshape(1, d),
        params["bn1_shift"].reshape(1, d),
        params["bn2_scale"].reshape(1, d),
        params["bn2_shift"].reshape(1, d),
        params["w_out"].reshape(1, d),
        jnp.broadcast_to(params["b_out"].reshape(1, 1), (1, d)),
    ]
    return jnp.concatenate(rows, axis=0).astype(jnp.float32)              # (11, D)


def _auto_batch_tile(b, n, f, d, alpha_itemsize, vmem_budget=24 * 1024 * 1024):
    # Fill the MXU M dimension (<= 256 rows of x @ W per step, <= 8 batch elems
    # for the static unroll) while keeping the grid length >= 2 so both v7x
    # TensorCores get work on the "parallel" axis, and keeping the double-
    # buffered block VMEM under budget (v7x: 64 MiB physical, 32 MiB scoped default).
    def vmem_bytes(t):
        ins = t * n * f * 4 + f * d * 4 + n * d * 4 + NUM_SLAB_ROWS * d * 4 + n * n * 4
        outs = t * n * 4 + t * n * n * alpha_itemsize
        return 2 * (ins + outs)          # double-buffered pipeline
    best = 1
    for t in range(1, b + 1):
        if t > 8 or t * n > 256:
            break
        if b % t:
            continue
        if (b // t < 2) and b > 1:
            continue
        if vmem_bytes(t) > vmem_budget:
            continue
        best = t
    return best


def gad_forward_pallas(x, params, mask_add, *, batch_tile=None,
                       alpha_dtype=jnp.float32):
    b, n, f = x.shape
    d = params["emb"].shape[1]
    alpha_itemsize = jnp.dtype(alpha_dtype).itemsize

    if batch_tile is None:
        batch_tile = _auto_batch_tile(b, n, f, d, alpha_itemsize)
    assert b % batch_tile == 0
    grid = b // batch_tile

    slab = _pack_params(params)

    def full(shape):
        return pl.BlockSpec(shape, lambda i: (0,) * len(shape))

    in_specs = [
        pl.BlockSpec((batch_tile, n, f), lambda i: (i, 0, 0)),   # x (batch tile)
        full((f, d)),                                            # GraphLayer lin weight
        full((n, d)),                                            # node embedding
        full((NUM_SLAB_ROWS, d)),                                # packed small params
        full((n, n)),                                            # additive edge mask
    ]
    out_specs = [
        pl.BlockSpec((1, 1, batch_tile * n), lambda i: (i, 0, 0)),  # lane-dense scores
        pl.BlockSpec((batch_tile, n, n), lambda i: (i, 0, 0)),      # dense attention
    ]
    out_shape = (
        jax.ShapeDtypeStruct((grid, 1, batch_tile * n), jnp.float32),
        jax.ShapeDtypeStruct((b, n, n), alpha_dtype),
    )

    cost = pl.CostEstimate(
        flops=int(2 * b * n * f * d          # x @ W
                  + 2 * b * n * n * d        # alpha @ Wx aggregation
                  + 6 * b * n * d            # attention logits + out layer
                  + 4 * n * d),              # embedding logit contributions
        transcendentals=int(b * n * n),      # softmax exp
        bytes_accessed=int(4 * (b * n * f + b * n)
                           + 4 * grid * (f * d + n * d + NUM_SLAB_ROWS * d + n * n)
                           + b * n * n * alpha_itemsize),
    )

    out_row, alpha = pl.pallas_call(
        gad_kernel,
        out_shape=out_shape,
        grid_spec=pltpu.PrefetchScalarGridSpec(
            num_scalar_prefetch=0,
            grid=(grid,),
            in_specs=in_specs,
            out_specs=out_specs,
        ),
        compiler_params=pltpu.CompilerParams(
            dimension_semantics=("parallel",)),
        cost_estimate=cost,
    )(x, params["w_lin"], params["emb"], slab, mask_add)
    return out_row, alpha


# --------------------------------------------------------------------------
# Parameter init (deterministic, synthetic — no checkpoint load)
# --------------------------------------------------------------------------
def init_params(key, node_num, dim, input_dim):
    ks = jax.random.split(key, 12)
    s = 0.1
    eps = 1e-5

    def fold_bn(gamma, beta, mean, var):
        scale = gamma / jnp.sqrt(var + eps)
        shift = beta - mean * scale
        return scale.reshape(1, -1), shift.reshape(1, -1)

    bn1_scale, bn1_shift = fold_bn(
        1.0 + s * jax.random.normal(ks[7], (dim,)), s * jax.random.normal(ks[8], (dim,)),
        jnp.zeros((dim,)), jnp.ones((dim,)))
    bn2_scale, bn2_shift = fold_bn(
        1.0 + s * jax.random.normal(ks[9], (dim,)), s * jax.random.normal(ks[10], (dim,)),
        jnp.zeros((dim,)), jnp.ones((dim,)))

    return {
        "emb": jax.random.normal(ks[0], (node_num, dim), jnp.float32),
        "w_lin": s * jax.random.normal(ks[1], (input_dim, dim), jnp.float32),
        "att_i": s * jax.random.normal(ks[2], (dim, 1), jnp.float32),
        "att_j": s * jax.random.normal(ks[3], (dim, 1), jnp.float32),
        "att_em_i": s * jax.random.normal(ks[4], (dim, 1), jnp.float32),
        "att_em_j": s * jax.random.normal(ks[5], (dim, 1), jnp.float32),
        "g_bias": s * jax.random.normal(ks[6], (1, dim), jnp.float32),
        "bn1_scale": bn1_scale, "bn1_shift": bn1_shift,
        "bn2_scale": bn2_scale, "bn2_shift": bn2_shift,
        "w_out": s * jax.random.normal(ks[11], (dim, 1), jnp.float32),
        "b_out": jnp.zeros((1, 1), jnp.float32) + 0.01,
    }


# --------------------------------------------------------------------------
# GAD.forward equivalent (glue: graph learning + edge-index bookkeeping)
# --------------------------------------------------------------------------
def gad_model(x, params, topk, *, alpha_dtype=jnp.float32):
    batch_num, node_num, _ = x.shape
    emb = params["emb"]

    # Encoder: weight_arr = cosine similarity of node embeddings.  Computed in
    # plain jnp (NOT a pallas_call): at (N, D) = (16, 32) the matmul is far below
    # one MXU tile and a separate launch + HBM round trip would dominate; XLA
    # fuses it straight into the top_k / adjacency glue below.
    e = emb.astype(jnp.float32)
    norm = jnp.sqrt(jnp.sum(e * e, axis=-1, keepdims=True))
    en = e / jnp.maximum(norm, 1e-8)                 # torch clamp(norm, min=eps)
    weight_arr = en @ en.T                           # (N, N)

    # learned graph: topk neighbours per node (glue — no clean Pallas topk)
    topk_idx = lax.top_k(weight_arr, topk)[1]        # (N, topk)
    gated_j = topk_idx.reshape(1, -1)
    gated_i = jnp.repeat(jnp.arange(node_num), topk).reshape(1, -1)
    gated_edge_index = jnp.concatenate([gated_j, gated_i], axis=0).astype(jnp.int32)

    # dense additive mask equivalent to remove_self_loops + add_self_loops;
    # identical per batch element (get_batch_edge_index only offsets node ids).
    adj = jnp.zeros((node_num, node_num), jnp.float32)
    adj = adj.at[jnp.arange(node_num)[:, None], topk_idx].set(1.0)
    eye = jnp.eye(node_num, dtype=jnp.float32)
    adj = adj * (1.0 - eye) + eye
    mask_add = jnp.where(adj > 0, 0.0, -1e30).astype(jnp.float32)

    out_row, alpha = gad_forward_pallas(x, params, mask_add, alpha_dtype=alpha_dtype)
    out = out_row.reshape(batch_num, node_num)       # (batch, node_num)

    # TODO(synk): alpha is returned as a dense (B, N, N) attention matrix rather
    # than the PyG (num_edges, heads) edge-list layout.
    return out, emb, gated_edge_index, batch_num, weight_arr, alpha


if __name__ == "__main__":
    B, N, F, D, TOPK = 2, 16, 10, 32, 5       # batch, nodes, input_dim, EmbSize, topk
    key = jax.random.PRNGKey(0)
    kx, kp = jax.random.split(key)
    x = jax.random.normal(kx, (B, N, F), jnp.float32)
    params = init_params(kp, N, D, F)

    out, embed_x, gated_edge_index, batch_num, weight_arr, alpha = gad_model(x, params, TOPK)
    jax.block_until_ready(out)
    jax.block_until_ready(alpha)

    assert out.shape == (B, N)
    assert embed_x.shape == (N, D)
    assert gated_edge_index.shape == (2, N * TOPK)
    assert weight_arr.shape == (N, N)
    assert alpha.shape == (B, N, N)
    assert bool(jnp.all(jnp.isfinite(out)))
    assert bool(jnp.all(jnp.isfinite(alpha)))
    print("KERNEL_OK")
</pallas_src>

<mosaic_0001>
module attributes {stable_mosaic.version = 11 : i64} {
  func.func @gad_kernel(%arg0: i32, %arg1: memref<1x16x10xf32, #tpu.memory_space<vmem>>, %arg2: memref<10x32xf32, #tpu.memory_space<vmem>>, %arg3: memref<16x32xf32, #tpu.memory_space<vmem>>, %arg4: memref<11x32xf32, #tpu.memory_space<vmem>>, %arg5: memref<16x16xf32, #tpu.memory_space<vmem>>, %arg6: memref<1x1x16xf32, #tpu.memory_space<vmem>>, %arg7: memref<1x16x16xf32, #tpu.memory_space<vmem>>) attributes {dimension_semantics = [#tpu.dimension_semantics<parallel>], iteration_bounds = array<i64: 2>, scalar_prefetch = 0 : i64, scratch_operands = 0 : i64, tpu.core_type = #tpu.core_type<tc>, window_params = [{transform_indices = @transform_0, window_bounds = array<i64: 1, 16, 10>}, {pipeline_mode = #tpu.pipeline_mode<synchronous>, transform_indices = @transform_1, window_bounds = array<i64: 10, 32>}, {pipeline_mode = #tpu.pipeline_mode<synchronous>, transform_indices = @transform_2, window_bounds = array<i64: 16, 32>}, {pipeline_mode = #tpu.pipeline_mode<synchronous>, transform_indices = @transform_3, window_bounds = array<i64: 11, 32>}, {pipeline_mode = #tpu.pipeline_mode<synchronous>, transform_indices = @transform_4, window_bounds = array<i64: 16, 16>}, {transform_indices = @transform_5, window_bounds = array<i64: 1, 1, 16>}, {transform_indices = @transform_6, window_bounds = array<i64: 1, 16, 16>}]} {
    %c0 = arith.constant 0 : index
    %c0_0 = arith.constant 0 : index
    %0 = vector.load %arg2[%c0, %c0_0] : memref<10x32xf32, #tpu.memory_space<vmem>>, vector<10x32xf32>
    %c0_1 = arith.constant 0 : index
    %c0_2 = arith.constant 0 : index
    %1 = vector.load %arg3[%c0_1, %c0_2] : memref<16x32xf32, #tpu.memory_space<vmem>>, vector<16x32xf32>
    %c0_3 = arith.constant 0 : index
    %c0_4 = arith.constant 0 : index
    %2 = vector.load %arg5[%c0_3, %c0_4] : memref<16x16xf32, #tpu.memory_space<vmem>>, vector<16x16xf32>
    %c0_5 = arith.constant 0 : index
    %c0_6 = arith.constant 0 : index
    %3 = vector.load %arg4[%c0_5, %c0_6] : memref<11x32xf32, #tpu.memory_space<vmem>>, vector<1x32xf32>
    %c1 = arith.constant 1 : index
    %c0_7 = arith.constant 0 : index
    %4 = vector.load %arg4[%c1, %c0_7] : memref<11x32xf32, #tpu.memory_space<vmem>>, vector<1x32xf32>
    %c2 = arith.constant 2 : index
    %c0_8 = arith.constant 0 : index
    %5 = vector.load %arg4[%c2, %c0_8] : memref<11x32xf32, #tpu.memory_space<vmem>>, vector<1x32xf32>
    %c3 = arith.constant 3 : index
    %c0_9 = arith.constant 0 : index
    %6 = vector.load %arg4[%c3, %c0_9] : memref<11x32xf32, #tpu.memory_space<vmem>>, vector<1x32xf32>
    %c4 = arith.constant 4 : index
    %c0_10 = arith.constant 0 : index
    %7 = vector.load %arg4[%c4, %c0_10] : memref<11x32xf32, #tpu.memory_space<vmem>>, vector<1x32xf32>
    %c5 = arith.constant 5 : index
    %c0_11 = arith.constant 0 : index
    %8 = vector.load %arg4[%c5, %c0_11] : memref<11x32xf32, #tpu.memory_space<vmem>>, vector<1x32xf32>
    %c6 = arith.constant 6 : index
    %c0_12 = arith.constant 0 : index
    %9 = vector.load %arg4[%c6, %c0_12] : memref<11x32xf32, #tpu.memory_space<vmem>>, vector<1x32xf32>
    %c7 = arith.constant 7 : index
    %c0_13 = arith.constant 0 : index
    %10 = vector.load %arg4[%c7, %c0_13] : memref<11x32xf32, #tpu.memory_space<vmem>>, vector<1x32xf32>
    %c8 = arith.constant 8 : index
    %c0_14 = arith.constant 0 : index
    %11 = vector.load %arg4[%c8, %c0_14] : memref<11x32xf32, #tpu.memory_space<vmem>>, vector<1x32xf32>
    %c9 = arith.constant 9 : index
    %c0_15 = arith.constant 0 : index
    %12 = vector.load %arg4[%c9, %c0_15] : memref<11x32xf32, #tpu.memory_space<vmem>>, vector<1x32xf32>
    %c10 = arith.constant 10 : index
    %c0_16 = arith.constant 0 : index
    %13 = vector.load %arg4[%c10, %c0_16] : memref<11x32xf32, #tpu.memory_space<vmem>>, vector<1x1xf32>
    %c0_17 = arith.constant 0 : index
    %c0_18 = arith.constant 0 : index
    %c0_19 = arith.constant 0 : index
    %14 = vector.load %arg1[%c0_17, %c0_18, %c0_19] : memref<1x16x10xf32, #tpu.memory_space<vmem>>, vector<1x16x10xf32>
    %15 = vector.shape_cast %14 : vector<1x16x10xf32> to vector<16x10xf32>
    %cst = arith.constant dense<0.000000e+00> : vector<16x32xf32>
    %16 = tpu.matmul %15, %0, %cst {dimension_numbers = #tpu.dot_dimension_numbers<[1], [0], [0], [1], [0, 0, 1, 1], [], []>} : vector<16x10xf32>, vector<10x32xf32>, vector<16x32xf32> -> vector<16x32xf32>
    %17 = arith.truncf %16 : vector<16x32xf32> to vector<16x32xbf16>
    %18 = vector.broadcast %5 : vector<1x32xf32> to vector<16x32xf32>
    %19 = arith.mulf %1, %18 : vector<16x32xf32>
    %cst_20 = arith.constant dense<0.000000e+00> : vector<16xf32>
    %20 = vector.multi_reduction <add>, %19, %cst_20 [1] : vector<16x32xf32> to vector<16xf32>
    %21 = vector.shape_cast %20 : vector<16xf32> to vector<16x1xf32>
    %cst_21 = arith.constant dense<0.000000e+00> : vector<1x16xf32>
    %22 = tpu.matmul %6, %1, %cst_21 {dimension_numbers = #tpu.dot_dimension_numbers<[1], [1], [0], [0], [0, 0, 1, 0], [], []>} : vector<1x32xf32>, vector<16x32xf32>, vector<1x16xf32> -> vector<1x16xf32>
    %23 = vector.broadcast %3 : vector<1x32xf32> to vector<16x32xf32>
    %24 = arith.mulf %16, %23 : vector<16x32xf32>
    %cst_22 = arith.constant dense<0.000000e+00> : vector<16xf32>
    %25 = vector.multi_reduction <add>, %24, %cst_22 [1] : vector<16x32xf32> to vector<16xf32>
    %26 = vector.shape_cast %25 : vector<16xf32> to vector<16x1xf32>
    %cst_23 = arith.constant dense<0.000000e+00> : vector<1x16xf32>
    %27 = tpu.matmul %4, %16, %cst_23 {dimension_numbers = #tpu.dot_dimension_numbers<[1], [1], [0], [0], [0, 0, 1, 0], [], []>} : vector<1x32xf32>, vector<16x32xf32>, vector<1x16xf32> -> vector<1x16xf32>
    %28 = arith.addf %26, %21 : vector<16x1xf32>
    %29 = arith.addf %27, %22 : vector<1x16xf32>
    %30 = vector.broadcast %28 : vector<16x1xf32> to vector<16x16xf32>
    %31 = vector.broadcast %29 : vector<1x16xf32> to vector<16x16xf32>
    %32 = arith.addf %30, %31 : vector<16x16xf32>
    %cst_24 = arith.constant 2.000000e-01 : f32
    %33 = vector.broadcast %cst_24 : f32 to vector<16x16xf32>
    %34 = arith.mulf %33, %32 : vector<16x16xf32>
    %35 = arith.maximumf %32, %34 : vector<16x16xf32>
    %36 = arith.addf %35, %2 : vector<16x16xf32>
    %cst_25 = arith.constant dense<0xFF800000> : vector<16xf32>
    %37 = vector.multi_reduction <maximumf>, %36, %cst_25 [1] : vector<16x16xf32> to vector<16xf32>
    %38 = vector.shape_cast %37 : vector<16xf32> to vector<16x1xf32>
    %39 = vector.broadcast %38 : vector<16x1xf32> to vector<16x16xf32>
    %40 = arith.subf %36, %39 : vector<16x16xf32>
    %41 = math.exp %40 : vector<16x16xf32>
    %cst_26 = arith.constant dense<0.000000e+00> : vector<16xf32>
    %42 = vector.multi_reduction <add>, %41, %cst_26 [1] : vector<16x16xf32> to vector<16xf32>
    %43 = vector.shape_cast %42 : vector<16xf32> to vector<16x1xf32>
    %44 = tpu.reciprocal %43 {approx = true} : vector<16x1xf32> -> vector<16x1xf32>
    %45 = vector.broadcast %44 : vector<16x1xf32> to vector<16x16xf32>
    %46 = arith.mulf %41, %45 : vector<16x16xf32>
    %c0_27 = arith.constant 0 : index
    %c0_28 = arith.constant 0 : index
    %c0_29 = arith.constant 0 : index
    %47 = vector.load %arg7[%c0_27, %c0_28, %c0_29] : memref<1x16x16xf32, #tpu.memory_space<vmem>>, vector<1x16x16xf32>
    %48 = vector.shape_cast %47 : vector<1x16x16xf32> to vector<16x16xf32>
    %49 = vector.shape_cast %46 : vector<16x16xf32> to vector<1x16x16xf32>
    tpu.vector_store %arg7[%c0_27, %c0_28, %c0_29], %49 {strides = array<i32>} : memref<1x16x16xf32, #tpu.memory_space<vmem>>, vector<1x16x16xf32>,
    %50 = arith.truncf %46 : vector<16x16xf32> to vector<16x16xbf16>
    %cst_30 = arith.constant dense<0.000000e+00> : vector<16x32xf32>
    %51 = tpu.matmul %50, %17, %cst_30 {dimension_numbers = #tpu.dot_dimension_numbers<[1], [0], [0], [1], [0, 0, 1, 1], [], []>} : vector<16x16xbf16>, vector<16x32xbf16>, vector<16x32xf32> -> vector<16x32xf32>
    %52 = vector.broadcast %7 : vector<1x32xf32> to vector<16x32xf32>
    %53 = arith.addf %51, %52 : vector<16x32xf32>
    %54 = vector.broadcast %8 : vector<1x32xf32> to vector<16x32xf32>
    %55 = arith.mulf %53, %54 : vector<16x32xf32>
    %56 = vector.broadcast %9 : vector<1x32xf32> to vector<16x32xf32>
    %57 = arith.addf %55, %56 : vector<16x32xf32>
    %cst_31 = arith.constant 0.000000e+00 : f32
    %58 = vector.broadcast %cst_31 : f32 to vector<16x32xf32>
    %59 = arith.maximumf %57, %58 : vector<16x32xf32>
    %60 = arith.mulf %59, %1 : vector<16x32xf32>
    %61 = vector.broadcast %10 : vector<1x32xf32> to vector<16x32xf32>
    %62 = arith.mulf %60, %61 : vector<16x32xf32>
    %63 = vector.broadcast %11 : vector<1x32xf32> to vector<16x32xf32>
    %64 = arith.addf %62, %63 : vector<16x32xf32>
    %cst_32 = arith.constant 0.000000e+00 : f32
    %65 = vector.broadcast %cst_32 : f32 to vector<16x32xf32>
    %66 = arith.maximumf %64, %65 : vector<16x32xf32>
    %cst_33 = arith.constant dense<0.000000e+00> : vector<1x16xf32>
    %67 = tpu.matmul %12, %66, %cst_33 {dimension_numbers = #tpu.dot_dimension_numbers<[1], [1], [0], [0], [0, 0, 1, 0], [], []>} : vector<1x32xf32>, vector<16x32xf32>, vector<1x16xf32> -> vector<1x16xf32>
    %68 = vector.broadcast %13 : vector<1x1xf32> to vector<1x16xf32>
    %69 = arith.addf %67, %68 : vector<1x16xf32>
    %70 = vector.shape_cast %69 : vector<1x16xf32> to vector<1x1x16xf32>
    %c0_34 = arith.constant 0 : index
    %c0_35 = arith.constant 0 : index
    %c0_36 = arith.constant 0 : index
    %71 = vector.load %arg6[%c0_34, %c0_35, %c0_36] : memref<1x1x16xf32, #tpu.memory_space<vmem>>, vector<1x1x16xf32>
    tpu.vector_store %arg6[%c0_34, %c0_35, %c0_36], %70 {strides = array<i32>} : memref<1x1x16xf32, #tpu.memory_space<vmem>>, vector<1x1x16xf32>,
    return
  }
  func.func @transform_0(%arg0: i32) -> (i32, i32, i32) {
    %c0_i32 = arith.constant 0 : i32
    %c0_i32_0 = arith.constant 0 : i32
    %c0_i32_1 = arith.constant 0 : i32
    return %arg0, %c0_i32, %c0_i32_0 : i32, i32, i32
  }
  func.func @transform_1(%arg0: i32) -> (i32, i32) {
    %c0_i32 = arith.constant 0 : i32
    %c0_i32_0 = arith.constant 0 : i32
    %c0_i32_1 = arith.constant 0 : i32
    return %c0_i32, %c0_i32_0 : i32, i32
  }
  func.func @transform_2(%arg0: i32) -> (i32, i32) {
    %c0_i32 = arith.constant 0 : i32
    %c0_i32_0 = arith.constant 0 : i32
    %c0_i32_1 = arith.constant 0 : i32
    return %c0_i32, %c0_i32_0 : i32, i32
  }
  func.func @transform_3(%arg0: i32) -> (i32, i32) {
    %c0_i32 = arith.constant 0 : i32
    %c0_i32_0 = arith.constant 0 : i32
    %c0_i32_1 = arith.constant 0 : i32
    return %c0_i32, %c0_i32_0 : i32, i32
  }
  func.func @transform_4(%arg0: i32) -> (i32, i32) {
    %c0_i32 = arith.constant 0 : i32
    %c0_i32_0 = arith.constant 0 : i32
    %c0_i32_1 = arith.constant 0 : i32
    return %c0_i32, %c0_i32_0 : i32, i32
  }
  func.func @transform_5(%arg0: i32) -> (i32, i32, i32) {
    %c0_i32 = arith.constant 0 : i32
    %c0_i32_0 = arith.constant 0 : i32
    %c0_i32_1 = arith.constant 0 : i32
    return %arg0, %c0_i32, %c0_i32_0 : i32, i32, i32
  }
  func.func @transform_6(%arg0: i32) -> (i32, i32, i32) {
    %c0_i32 = arith.constant 0 : i32
    %c0_i32_0 = arith.constant 0 : i32
    %c0_i32_1 = arith.constant 0 : i32
    return %arg0, %c0_i32, %c0_i32_0 : i32, i32, i32
  }
}

</mosaic_0001>

<llo_original>
// kernel: tpu_custom_call.1
$region0: #{tpu_custom_call.1}
  #allocation0 [shape = 'u32[]', space=smem, size = 0x4, offset = 0x4, fixed_abs, tag = 'smem constant byte address 0x4 - core index']
  #allocation1 [shape = 'u32[72,128]{1,0:T(1,128)}', space=vmem, size = 0x9000, scoped, tag = 'internal scratch']
  %s0 = inlined_call_operand.vmem [shape: f32[2,16,10], index: 0, kind: input, shape index: {}]
  %s1 = inlined_call_operand.vmem [shape: f32[10,32], index: 1, kind: input, shape index: {}]
  %s2 = inlined_call_operand.vmem [shape: f32[16,32], index: 2, kind: input, shape index: {}]
  %s3 = inlined_call_operand.vmem [shape: f32[11,32], index: 3, kind: input, shape index: {}]
  %s4 = inlined_call_operand.hbm [shape: f32[16,16], index: 4, kind: input, shape index: {}]
  %s5 = inlined_call_operand.hbm [shape: f32[2,1,16], index: 5, kind: output, shape index: {0}]
  %s6 = inlined_call_operand.hbm [shape: f32[2,16,16], index: 6, kind: output, shape index: {1}]
  %7 = xla_tuple %s5, %s6
  %s8 = sld [smem:[#allocation0]]
  $region65: #{tpu_custom_call.1} parent=0
    _
  %s10 = ssub.s32 1, %s8
  %s11 = scalar_select 0, %s10, %s8
  $region1: #{tpu_custom_call.1} parent=0
    #allocation2 [shape = 'u8[8192]{0}', space=vmem, size = 0x2000, scoped, tag = 'input window, operand 4, single buffered']
    #allocation3 [shape = 's32[2]{0}', space=sflag, size = 0x8, scoped, tag = 'scoped memory for tpu_custom_call.1']
    #allocation4 [shape = 's32[2]{0}', space=sflag, size = 0x8, scoped, tag = 'scoped memory for tpu_custom_call.1']
    #allocation5 [shape = 'u8[1024]{0}', space=vmem, size = 0x400, scoped, tag = 'output window, operand 0']
    #allocation6 [shape = 'u8[16384]{0}', space=vmem, size = 0x4000, scoped, tag = 'output window, operand 1']
    #allocation7 [shape = 's32[2]{0}', space=sflag, size = 0x8, scoped, tag = 'scoped memory for tpu_custom_call.1']
    %12 = vsyncpa [#allocation3], 0
    %13 = vsyncpa [#allocation4], 0
    %s14 = scalar_lea.sflag [#allocation4], 1
    %15 = vsyncpa %s14, 0
    %16 = vsyncpa [#allocation7], 0
    %s17 = scalar_lea.sflag [#allocation7], 1
    %18 = vsyncpa %s17, 0
    loop: start=0, step=1, limit=4
    $region2: #{tpu_custom_call.1} parent=1 // loop_pre_header
      _
    $region3: #{tpu_custom_call.1} parent=1 // loop_header
      %s20 = sphi 0, %s24
      %p21 = scmp.ge.s32.totalorder %s20, 4
      %s30 = sphi 0, %s32
      %s33 = sphi 0, %s30
      %s34 = sphi 0, %s33
      %s50 = sphi 0, %s34
      %s54 = sphi 0, %s54
      %s56 = sphi 0, %s54
      %s57 = sphi 0, %s56
      %s71 = sphi 0, %s57
      %s75 = sphi 0, %s75
      %s77 = sphi 0, %s75
      %s78 = sphi 0, %s77
      %s92 = sphi 0, %s78
      %s96 = sphi 0, %s96
      %s98 = sphi 0, %s96
      %s99 = sphi 0, %s98
      %s113 = sphi 0, %s99
      %s117 = sphi 0, %s117
      %s119 = sphi 0, %s117
      %s120 = sphi 0, %s119
      %s134 = sphi 0, %s120
      %s140 = sphi 0, %s142
      %s143 = sphi 0, %s140
      %s144 = sphi 0, %s143
      %s160 = sphi 0, %s144
      %s166 = sphi 0, %s168
      %s169 = sphi 0, %s166
      %s170 = sphi 0, %s169
      %s186 = sphi 0, %s170
    $region4: #{tpu_custom_call.1} parent=1 // loop_header_branch
      %23 = sbr.rel (%p21) target = $region8
    $region5: #{tpu_custom_call.1} parent=1 // loop_body
      %s25 = ssub.s32 %s20, 1
      %s26 = ssub.s32 %s20, 2
      %s27 = sadd.s32 %s20, 1
      %s28 = ssub.s32 %s20, %s27
      %p29 = scmp.eq.s32.totalorder %s28, 0
      %s31 = sadd.s32 %s30, 1
      %s32 = scalar_select %p29, %s30, %s31
      %p35 = pneg %p29
      %p36 = scmp.eq.s32.totalorder %s20, 1
      %p37 = por %p35, %p36
      %p38 = scmp.ne.s32.totalorder %s30, %s33
      %p39 = scmp.eq.s32.totalorder %s20, 0
      %p40 = por %p38, %p39
      %p41 = scmp.ne.s32.totalorder %s30, %s33
      %p42 = scmp.eq.s32.totalorder %s25, 1
      %p43 = por %p41, %p42
      %p44 = scmp.ne.s32.totalorder %s33, %s34
      %p45 = scmp.eq.s32.totalorder %s25, 0
      %p46 = por %p44, %p45
      %p47 = scmp.ne.s32.totalorder %s33, %s34
      %p48 = scmp.eq.s32.totalorder %s26, 1
      %p49 = por %p47, %p48
      %p51 = scmp.ne.s32.totalorder %s34, %s50
      %p52 = scmp.eq.s32.totalorder %s26, 0
      %p53 = por %p51, %p52
      %s55 = sadd.s32 %s54, 1
      %p58 = scmp.eq.s32.totalorder %s20, 1
      %p59 = scmp.ne.s32.totalorder %s54, %s56
      %p60 = scmp.eq.s32.totalorder %s20, 0
      %p61 = por %p59, %p60
      %p62 = scmp.ne.s32.totalorder %s54, %s56
      %p63 = scmp.eq.s32.totalorder %s25, 1
      %p64 = por %p62, %p63
      %p65 = scmp.ne.s32.totalorder %s56, %s57
      %p66 = scmp.eq.s32.totalorder %s25, 0
      %p67 = por %p65, %p66
      %p68 = scmp.ne.s32.totalorder %s56, %s57
      %p69 = scmp.eq.s32.totalorder %s26, 1
      %p70 = por %p68, %p69
      %p72 = scmp.ne.s32.totalorder %s57, %s71
      %p73 = scmp.eq.s32.totalorder %s26, 0
      %p74 = por %p72, %p73
      %s76 = sadd.s32 %s75, 1
      %p79 = scmp.eq.s32.totalorder %s20, 1
      %p80 = scmp.ne.s32.totalorder %s75, %s77
      %p81 = scmp.eq.s32.totalorder %s20, 0
      %p82 = por %p80, %p81
      %p83 = scmp.ne.s32.totalorder %s75, %s77
      %p84 = scmp.eq.s32.totalorder %s25, 1
      %p85 = por %p83, %p84
      %p86 = scmp.ne.s32.totalorder %s77, %s78
      %p87 = scmp.eq.s32.totalorder %s25, 0
      %p88 = por %p86, %p87
      %p89 = scmp.ne.s32.totalorder %s77, %s78
      %p90 = scmp.eq.s32.totalorder %s26, 1
      %p91 = por %p89, %p90
      %p93 = scmp.ne.s32.totalorder %s78, %s92
      %p94 = scmp.eq.s32.totalorder %s26, 0
      %p95 = por %p93, %p94
      %s97 = sadd.s32 %s96, 1
      %p100 = scmp.eq.s32.totalorder %s20, 1
      %p101 = scmp.ne.s32.totalorder %s96, %s98
      %p102 = scmp.eq.s32.totalorder %s20, 0
      %p103 = por %p101, %p102
      %p104 = scmp.ne.s32.totalorder %s96, %s98
      %p105 = scmp.eq.s32.totalorder %s25, 1
      %p106 = por %p104, %p105
      %p107 = scmp.ne.s32.totalorder %s98, %s99
      %p108 = scmp.eq.s32.totalorder %s25, 0
      %p109 = por %p107, %p108
      %p110 = scmp.ne.s32.totalorder %s98, %s99
      %p111 = scmp.eq.s32.totalorder %s26, 1
      %p112 = por %p110, %p111
      %p114 = scmp.ne.s32.totalorder %s99, %s113
      %p115 = scmp.eq.s32.totalorder %s26, 0
      %p116 = por %p114, %p115
      %s118 = sadd.s32 %s117, 1
      %p121 = scmp.eq.s32.totalorder %s20, 1
      %p122 = scmp.ne.s32.totalorder %s117, %s119
      %p123 = scmp.eq.s32.totalorder %s20, 0
      %p124 = por %p122, %p123
      %p125 = scmp.ne.s32.totalorder %s117, %s119
      %p126 = scmp.eq.s32.totalorder %s25, 1
      %p127 = por %p125, %p126
      %p128 = scmp.ne.s32.totalorder %s119, %s120
      %p129 = scmp.eq.s32.totalorder %s25, 0
      %p130 = por %p128, %p129
      %p131 = scmp.ne.s32.totalorder %s119, %s120
      %p132 = scmp.eq.s32.totalorder %s26, 1
      %p133 = por %p131, %p132
      %p135 = scmp.ne.s32.totalorder %s120, %s134
      %p136 = scmp.eq.s32.totalorder %s26, 0
      %p137 = por %p135, %p136
      %s138 = ssub.s32 %s20, %s27
      %p139 = scmp.eq.s32.totalorder %s138, 0
      %s141 = sadd.s32 %s140, 1
      %s142 = scalar_select %p139, %s140, %s141
      %p145 = pneg %p139
      %p146 = scmp.eq.s32.totalorder %s20, 1
      %p147 = por %p145, %p146
      %p148 = scmp.ne.s32.totalorder %s140, %s143
      %p149 = scmp.eq.s32.totalorder %s20, 0
      %p150 = por %p148, %p149
      %p151 = scmp.ne.s32.totalorder %s140, %s143
      %p152 = scmp.eq.s32.totalorder %s25, 1
      %p153 = por %p151, %p152
      %p154 = scmp.ne.s32.totalorder %s143, %s144
      %p155 = scmp.eq.s32.totalorder %s25, 0
      %p156 = por %p154, %p155
      %p157 = scmp.ne.s32.totalorder %s143, %s144
      %p158 = scmp.eq.s32.totalorder %s26, 1
      %p159 = por %p157, %p158
      %p161 = scmp.ne.s32.totalorder %s144, %s160
      %p162 = scmp.eq.s32.totalorder %s26, 0
      %p163 = por %p161, %p162
      %s164 = ssub.s32 %s20, %s27
      %p165 = scmp.eq.s32.totalorder %s164, 0
      %s167 = sadd.s32 %s166, 1
      %s168 = scalar_select %p165, %s166, %s167
      %p171 = pneg %p165
      %p172 = scmp.eq.s32.totalorder %s20, 1
      %p173 = por %p171, %p172
      %p174 = scmp.ne.s32.totalorder %s166, %s169
      %p175 = scmp.eq.s32.totalorder %s20, 0
      %p176 = por %p174, %p175
      %p177 = scmp.ne.s32.totalorder %s166, %s169
      %p178 = scmp.eq.s32.totalorder %s25, 1
      %p179 = por %p177, %p178
      %p180 = scmp.ne.s32.totalorder %s169, %s170
      %p181 = scmp.eq.s32.totalorder %s25, 0
      %p182 = por %p180, %p181
      %p183 = scmp.ne.s32.totalorder %s169, %s170
      %p184 = scmp.eq.s32.totalorder %s26, 1
      %p185 = por %p183, %p184
      %p187 = scmp.ne.s32.totalorder %s170, %s186
      %p188 = scmp.eq.s32.totalorder %s26, 0
      %p189 = por %p187, %p188
      %p190 = scmp.le.s32.totalorder 1, %s20
      %p191 = scmp.lt.s32.totalorder %s20, 3
      %p192 = pnand %p190, %p191
      %p193 = pneg %p192
      // Predicated region
      $region9: #{tpu_custom_call.1} parent=5 // pred_check
        _
      $region10: #{tpu_custom_call.1} parent=5 // pred_check_branch
        %195 = sbr.rel (%p192) target = $region12
      $region11: #{tpu_custom_call.1} parent=5 // pred_region
        %s196 = ssub.s32 %s20, 1
        // Predicated region
        $region13: #{tpu_custom_call.1} parent=11 // pred_check
          %p197 = pneg %p67
        $region14: #{tpu_custom_call.1} parent=11 // pred_check_branch
          %199 = sbr.rel (%p197) target = $region16
        $region15: #{tpu_custom_call.1} parent=11 // pred_region
          _
        $region16: #{tpu_custom_call.1} parent=11 // pred_fallthru
          _
        // Predicated region
        $region17: #{tpu_custom_call.1} parent=11 // pred_check
          %p200 = pneg %p88
        $region18: #{tpu_custom_call.1} parent=11 // pred_check_branch
          %202 = sbr.rel (%p200) target = $region20
        $region19: #{tpu_custom_call.1} parent=11 // pred_region
          _
        $region20: #{tpu_custom_call.1} parent=11 // pred_fallthru
          _
        // Predicated region
        $region21: #{tpu_custom_call.1} parent=11 // pred_check
          %p203 = pneg %p109
        $region22: #{tpu_custom_call.1} parent=11 // pred_check_branch
          %205 = sbr.rel (%p203) target = $region24
        $region23: #{tpu_custom_call.1} parent=11 // pred_region
          _
        $region24: #{tpu_custom_call.1} parent=11 // pred_fallthru
          _
        // Predicated region
        $region25: #{tpu_custom_call.1} parent=11 // pred_check
          %p206 = pneg %p130
        $region26: #{tpu_custom_call.1} parent=11 // pred_check_branch
          %208 = sbr.rel (%p206) target = $region28
        $region27: #{tpu_custom_call.1} parent=11 // pred_region
          %210 = vsyncadd [#allocation3], 0
          %s211 = sshll.u32 %s4, 4
          %s212 = int_to_ptr.hbm [resolvable:$true] %s211
          %s213 = sshll.u32 [#allocation2], 4
          %s214 = int_to_ptr.vmem [resolvable:$true] %s213
          %219 = dma.hbm_to_vmem [thread:$0]  %s212, 256, %s214, [#allocation3], 128, 128, 8
        $region28: #{tpu_custom_call.1} parent=11 // pred_fallthru
          _
      $region12: #{tpu_custom_call.1} parent=5 // pred_fallthru
        _
      %p220 = scmp.lt.s32.totalorder %s20, 2
      // Predicated region
      $region29: #{tpu_custom_call.1} parent=5 // pred_check
        %p221 = pneg %p220
      $region30: #{tpu_custom_call.1} parent=5 // pred_check_branch
        %223 = sbr.rel (%p221) target = $region32
      $region31: #{tpu_custom_call.1} parent=5 // pred_region
        // Predicated region
        $region33: #{tpu_custom_call.1} parent=31 // pred_check
          %p224 = pneg %p40
        $region34: #{tpu_custom_call.1} parent=31 // pred_check_branch
          %226 = sbr.rel (%p224) target = $region36
        $region35: #{tpu_custom_call.1} parent=31 // pred_region
          %p227 = scmp.lt.s32.totalorder %s20, 1
          %s228 = scalar_select %p227, %s20, 1
          %s229 = smul.addr %s228, 2
          %s230 = smul.addr %s229, 8
          %s231 = scalar_lea.vmem %s0, %s230
        $region36: #{tpu_custom_call.1} parent=31 // pred_fallthru
          _
      $region32: #{tpu_custom_call.1} parent=5 // pred_fallthru
        _
      %p232 = scmp.le.s32.totalorder 1, %s20
      %p233 = scmp.lt.s32.totalorder %s20, 3
      %p234 = pnand %p232, %p233
      %p235 = pneg %p234
      // Predicated region
      $region37: #{tpu_custom_call.1} parent=5 // pred_check
        _
      $region38: #{tpu_custom_call.1} parent=5 // pred_check_branch
        %237 = sbr.rel (%p234) target = $region40
      $region39: #{tpu_custom_call.1} parent=5 // pred_region
        %s238 = ssub.s32 %s20, 1
        // Predicated region
        $region41: #{tpu_custom_call.1} parent=39 // pred_check
          %p239 = pneg %p130
        $region42: #{tpu_custom_call.1} parent=39 // pred_check_branch
          %241 = sbr.rel (%p239) target = $region44
        $region43: #{tpu_custom_call.1} parent=39 // pred_region
          %243 = dma.done [#allocation3], 256
        $region44: #{tpu_custom_call.1} parent=39 // pred_fallthru
          _
        %p244 = scmp.lt.s32.totalorder %s25, 1
        %s245 = scalar_select %p244, %s25, 1
        %s246 = smul.addr %s245, 2
        %s247 = smul.addr %s246, 8
        %s248 = scalar_lea.vmem %s0, %s247
        %p249 = pneg %p46
        %p250 = pneg %p43
        %p251 = pneg %p67
        %p252 = pneg %p64
        %p253 = pneg %p88
        %p254 = pneg %p85
        %p255 = pneg %p109
        %p256 = pneg %p106
        %p257 = pneg %p130
        %p258 = pneg %p127
        %p259 = pneg %p156
        %p260 = pneg %p153
        %s261 = sand.u32 %s143, 1
        %s262 = scalar_lea.sflag [#allocation4], %s261
        %s263 = sand.u32 %s143, 1
        %s264 = scalar_lea.vmem [#allocation5], %s263
        %p265 = pneg %p182
        %p266 = pneg %p179
        %s267 = sand.u32 %s169, 1
        %s268 = scalar_lea.sflag [#allocation7], %s267
        %s269 = sand.u32 %s169, 1
        %s270 = smul.addr %s269, 16
        %s271 = scalar_lea.vmem [#allocation6], %s270
        %p272 = scmp.lt.s32.totalorder %s25, 1
        %s273 = scalar_select %p272, %s25, 1
        %s274 = smul.addr %s273, 2
        %s275 = smul.addr %s274, 8
        %s276 = scalar_lea.vmem %s0, %s275
        %v278 = vld [vmem:[%s1] sm:$0xff]
        %v279 = vld [vmem:[%s1 + $0x8] sm:$0x3]
        %v280 = vld [vmem:[%s2] sm:$0xff]
        %v281 = vld [vmem:[%s2 + $0x8] sm:$0xff]
        %v282 = vld [vmem:[#allocation2] sm:$0xff]
        %v283 = vld [vmem:[#allocation2 + $0x8] sm:$0xff]
        %v284 = vld [vmem:[%s3] sm:$0x1]
        %v285 = vld [vmem:[%s3 + $0x1] sm:$0x1]
        %v286 = vld [vmem:[%s3 + $0x2] sm:$0x1]
        %v287 = vld [vmem:[%s3 + $0x3] sm:$0x1]
        %v288 = vld [vmem:[%s3 + $0x4] sm:$0x1]
        %v289 = vld [vmem:[%s3 + $0x5] sm:$0x1]
        %v290 = vld [vmem:[%s3 + $0x6] sm:$0x1]
        %v291 = vld [vmem:[%s3 + $0x7] sm:$0x1]
        %v292 = vld [vmem:[%s3 + $0x8] sm:$0x1]
        %v293 = vld [vmem:[%s3 + $0x9] sm:$0x1]
        %v294 = vld [vmem:[%s3 + $0xa] sm:$0x1]
        %v295 = vld [vmem:[%s276] sm:$0xff]
        %v296 = vld [vmem:[%s276 + $0x8] sm:$0xff]
        %vm297 = vcmask 80896
        %v299 = vsel %vm297, %v295, 0
        %v302 = vsel %vm297, %v296, 0
        %vm304 = vcmask 1041408
        %v306 = vsel %vm304, %v279, 0
        %308 = vmatpush.msra.mxu0 0.0
        %309 = vmatpush.msra.mxu0 0.0
        %310 = vmatpush.msra.mxu0 0.0
        %311 = vmatpush.msra.mxu0 0.0
        %312 = vmatpush.msra.mxu0 0.0
        %313 = vmatpush.msra.mxu0 0.0
        %314 = vmatpush.msra.mxu0 0.0
        %315 = vmatpush.msra.mxu0 0.0
        %316 = vmatpush.msra.mxu0 0.0
        %317 = vmatpush.msra.mxu0 0.0
        %318 = vmatpush.msra.mxu0 0.0
        %319 = vmatpush.msra.mxu0 0.0
        %320 = vmatpush.msra.mxu0 0.0
        %321 = vmatpush.msra.mxu0 0.0
        %322 = vmatpush.msra.mxu0 %v306
        %323 = vmatpush.msra.mxu0 %v278
        %324 = vmatmul.f32.gmra.mxu0 %v299
        %v325 = vpop.f32.mrf.mxu0
        %v326 = vadd.f32 0.0, %v325
        %327 = vmatmul.f32.gmra.mxu0 %v302
        %v328 = vpop.f32.mrf.mxu0
        %v329 = vadd.f32 0.0, %v328
        %330 = vdwg.mxu0
        %v331 = vpack.c.bf16 %v329, %v326
        %v332 = vperm.slane %v286, 0
        %v333 = vmul.f32 %v280, %v332
        %v334 = vmul.f32 %v281, %v332
        %vm335 = vcmask 261120
        %v336 = vsel %vm335, %v333, 0.0
        %337 = vadd.xlane.f32.xlu0 %v336
        %v338 = vpop.xlane.xlu0 %337
        %v339 = vsel %vm335, %v334, 0.0
        %340 = vadd.xlane.f32.xlu0 %v339
        %v341 = vpop.xlane.xlu0 %340
        %v343 = vsel %vm335, %v287, 0
        %v346 = vsel %vm335, %v280, 0
        %v349 = vsel %vm335, %v281, 0
        %351 = vmatpush.xpose.msra.mxu0 0.0
        %352 = vmatpush.xpose.msra.mxu0 0.0
        %353 = vmatpush.xpose.msra.mxu0 0.0
        %354 = vmatpush.xpose.msra.mxu0 0.0
        %355 = vmatpush.xpose.msra.mxu0 0.0
        %356 = vmatpush.xpose.msra.mxu0 0.0
        %357 = vmatpush.xpose.msra.mxu0 0.0
        %358 = vmatpush.xpose.msra.mxu0 0.0
        %359 = vmatpush.xpose.msra.mxu0 0.0
        %360 = vmatpush.xpose.msra.mxu0 0.0
        %361 = vmatpush.xpose.msra.mxu0 0.0
        %362 = vmatpush.xpose.msra.mxu0 0.0
        %363 = vmatpush.xpose.msra.mxu0 0.0
        %364 = vmatpush.xpose.msra.mxu0 0.0
        %365 = vmatpush.xpose.msra.mxu0 %v349
        %366 = vmatpush.xpose.msra.mxu0 %v346
        %367 = vmatmul.f32.gmra.mxu0 %v343
        %v368 = vpop.f32.mrf.mxu0
        %v369 = vadd.f32 0.0, %v368
        %370 = vdwg.mxu0
        %v371 = vperm.slane %v284, 0
        %v372 = vmul.f32 %v326, %v371
        %v373 = vmul.f32 %v329, %v371
        %v374 = vsel %vm335, %v372, 0.0
        %375 = vadd.xlane.f32.xlu0 %v374
        %v376 = vpop.xlane.xlu0 %375
        %v377 = vsel %vm335, %v373, 0.0
        %378 = vadd.xlane.f32.xlu0 %v377
        %v379 = vpop.xlane.xlu0 %378
        %v380 = vadd.f32 %v376, %v338
        %v381 = vadd.f32 %v379, %v341
        %v383 = vsel %vm335, %v285, 0
        %v386 = vsel %vm335, %v326, 0
        %v389 = vsel %vm335, %v329, 0
        %391 = vmatpush.xpose.msra.mxu0 0.0
        %392 = vmatpush.xpose.msra.mxu0 0.0
        %393 = vmatpush.xpose.msra.mxu0 0.0
        %394 = vmatpush.xpose.msra.mxu0 0.0
        %395 = vmatpush.xpose.msra.mxu0 0.0
        %396 = vmatpush.xpose.msra.mxu0 0.0
        %397 = vmatpush.xpose.msra.mxu0 0.0
        %398 = vmatpush.xpose.msra.mxu0 0.0
        %399 = vmatpush.xpose.msra.mxu0 0.0
        %400 = vmatpush.xpose.msra.mxu0 0.0
        %401 = vmatpush.xpose.msra.mxu0 0.0
        %402 = vmatpush.xpose.msra.mxu0 0.0
        %403 = vmatpush.xpose.msra.mxu0 0.0
        %404 = vmatpush.xpose.msra.mxu0 0.0
        %405 = vmatpush.xpose.msra.mxu0 %v389
        %406 = vmatpush.xpose.msra.mxu0 %v386
        %407 = vmatmul.f32.gmra.mxu0 %v383
        %v408 = vpop.f32.mrf.mxu0
        %v409 = vadd.f32 %v369, %v408
        %410 = vdwg.mxu0
        %v411 = vperm.slane %v409, 0
        %v412 = vadd.f32 %v380, %v411
        %v413 = vadd.f32 %v381, %v411
        %v414 = vmul.f32 %v412, 0.2
        %v415 = vmul.f32 %v413, 0.2
        %v416 = vmax.f32 %v412, %v414
        %v417 = vmax.f32 %v413, %v415
        %v418 = vadd.f32 %v416, %v282
        %v419 = vadd.f32 %v417, %v283
        %vm420 = vcmask 130048
        %v421 = vsel %vm420, %v418, -inf
        %422 = vmax.xlane.f32.xlu0 %v421
        %v423 = vpop.xlane.xlu0 %422
        %v424 = vsel %vm420, %v419, -inf
        %425 = vmax.xlane.f32.xlu0 %v424
        %v426 = vpop.xlane.xlu0 %425
        %v427 = vsub.f32 %v418, %v423
        %v428 = vsub.f32 %v419, %v426
        %v429 = vmul.f32 %v427, 1.442695
        %v430 = vpow.pop %v429
        %v431 = vmul.f32 %v428, 1.442695
        %v432 = vpow.pop %v431
        %v433 = vsel %vm420, %v430, 0.0
        %434 = vadd.xlane.f32.xlu0 %v433
        %v435 = vpop.xlane.xlu0 %434
        %v436 = vsel %vm420, %v432, 0.0
        %437 = vadd.xlane.f32.xlu0 %v436
        %v438 = vpop.xlane.xlu0 %437
        %v439 = vrcp.pop %v435
        %v440 = vrcp.pop %v438
        %v441 = vmul.f32 %v430, %v439
        %v442 = vmul.f32 %v432, %v440
        %443 = vst.msk [vmem:[%s271] sm:$0xff] %vm420, %v441
        %444 = vst.msk [vmem:[%s271 + $0x8] sm:$0xff] %vm420, %v442
        %v445 = vpack.c.bf16 %v442, %v441
        %v446 = vperm.slane %v288, 0
        %v448 = vsel %vm420, %v445, 0
        %450 = vmatpush.bf16.msra.mxu0 0
        %451 = vmatpush.bf16.msra.mxu0 0
        %452 = vmatpush.bf16.msra.mxu0 0
        %453 = vmatpush.bf16.msra.mxu0 0
        %454 = vmatpush.bf16.msra.mxu0 0
        %455 = vmatpush.bf16.msra.mxu0 0
        %456 = vmatpush.bf16.msra.mxu0 0
        %457 = vmatpush.bf16.msra.mxu0 %v331
        %458 = vmatmul.bf16.gmra.mxu0 %v448
        %v459 = vpop.f32.mrf.mxu0
        %v460 = vadd.f32 %v446, %v459
        %v461 = vpop.f32.mrf.mxu0
        %v462 = vadd.f32 %v446, %v461
        %463 = vdwg.mxu0
        %v464 = vperm.slane %v289, 0
        %v465 = vmul.f32 %v460, %v464
        %v466 = vmul.f32 %v462, %v464
        %v467 = vperm.slane %v290, 0
        %v468 = vadd.f32 %v465, %v467
        %v469 = vadd.f32 %v466, %v467
        %v470 = vmax.f32 %v468, 0.0
        %v471 = vmax.f32 %v469, 0.0
        %v472 = vmul.f32 %v470, %v280
        %v473 = vmul.f32 %v471, %v281
        %v474 = vperm.slane %v291, 0
        %v475 = vmul.f32 %v472, %v474
        %v476 = vmul.f32 %v473, %v474
        %v477 = vperm.slane %v292, 0
        %v478 = vadd.f32 %v475, %v477
        %v479 = vadd.f32 %v476, %v477
        %v480 = vmax.f32 %v478, 0.0
        %v481 = vmax.f32 %v479, 0.0
        %483 = vset.pattern.permute.xlu0 0
        %484 = vperm.xlu0 %483, %v294
        %v485 = vpop.permute.xlu0 %484
        %v488 = vsel %vm335, %v293, 0
        %v491 = vsel %vm335, %v480, 0
        %v494 = vsel %vm335, %v481, 0
        %496 = vmatpush.xpose.msra.mxu0 0.0
        %497 = vmatpush.xpose.msra.mxu0 0.0
        %498 = vmatpush.xpose.msra.mxu0 0.0
        %499 = vmatpush.xpose.msra.mxu0 0.0
        %500 = vmatpush.xpose.msra.mxu0 0.0
        %501 = vmatpush.xpose.msra.mxu0 0.0
        %502 = vmatpush.xpose.msra.mxu0 0.0
        %503 = vmatpush.xpose.msra.mxu0 0.0
        %504 = vmatpush.xpose.msra.mxu0 0.0
        %505 = vmatpush.xpose.msra.mxu0 0.0
        %506 = vmatpush.xpose.msra.mxu0 0.0
        %507 = vmatpush.xpose.msra.mxu0 0.0
        %508 = vmatpush.xpose.msra.mxu0 0.0
        %509 = vmatpush.xpose.msra.mxu0 0.0
        %510 = vmatpush.xpose.msra.mxu0 %v494
        %511 = vmatpush.xpose.msra.mxu0 %v491
        %512 = vmatmul.f32.gmra.mxu0 %v488
        %v513 = vpop.f32.mrf.mxu0
        %v514 = vadd.f32 %v485, %v513
        %515 = vdwg.mxu0
        %vm516 = vcmask 122880
        %517 = vst.msk [vmem:[%s264] sm:$0x1] %vm516, %v514
        %s518 = sand.u32 %s143, 1
        %s519 = scalar_lea.sflag [#allocation4], %s518
        %s520 = sand.u32 %s143, 1
        %s521 = scalar_lea.vmem [#allocation5], %s520
        %s522 = sand.u32 %s169, 1
        %s523 = scalar_lea.sflag [#allocation7], %s522
        %s524 = sand.u32 %s169, 1
        %s525 = smul.addr %s524, 16
        %s526 = scalar_lea.vmem [#allocation6], %s525
        // Predicated region
        $region45: #{tpu_custom_call.1} parent=39 // pred_check
          %p527 = pneg %p153
        $region46: #{tpu_custom_call.1} parent=39 // pred_check_branch
          %529 = sbr.rel (%p527) target = $region48
        $region47: #{tpu_custom_call.1} parent=39 // pred_region
          %531 = vsyncadd %s519, 0
          %s532 = scalar_lea.hbm %s5, %s25
          %s534 = sshll.u32 %s521, 4
          %s535 = int_to_ptr.vmem [resolvable:$true] %s534
          %s536 = sshll.u32 %s532, 4
          %s537 = int_to_ptr.hbm [resolvable:$true] %s536
          %539 = dma.vmem_to_hbm [thread:$0]  %s535, 16, %s537, %s519
        $region48: #{tpu_custom_call.1} parent=39 // pred_fallthru
          _
        // Predicated region
        $region49: #{tpu_custom_call.1} parent=39 // pred_check
          %p540 = pneg %p179
        $region50: #{tpu_custom_call.1} parent=39 // pred_check_branch
          %542 = sbr.rel (%p540) target = $region52
        $region51: #{tpu_custom_call.1} parent=39 // pred_region
          %544 = vsyncadd %s523, 0
          %s545 = smul.addr %s25, 2
          %s546 = smul.addr %s545, 8
          %s547 = scalar_lea.hbm %s6, %s546
          %s548 = sshll.u32 %s526, 4
          %s549 = int_to_ptr.vmem [resolvable:$true] %s548
          %s550 = sshll.u32 %s547, 4
          %s551 = int_to_ptr.hbm [resolvable:$true] %s550
          %556 = dma.vmem_to_hbm [thread:$0]  %s549, 256, %s551, %s523, 128, 128, 8
        $region52: #{tpu_custom_call.1} parent=39 // pred_fallthru
          _
      $region40: #{tpu_custom_call.1} parent=5 // pred_fallthru
        _
      %p557 = scmp.le.s32.totalorder 2, %s20
      // Predicated region
      $region53: #{tpu_custom_call.1} parent=5 // pred_check
        %p558 = pneg %p557
      $region54: #{tpu_custom_call.1} parent=5 // pred_check_branch
        %560 = sbr.rel (%p558) target = $region56
      $region55: #{tpu_custom_call.1} parent=5 // pred_region
        %s561 = ssub.s32 %s20, 2
        // Predicated region
        $region57: #{tpu_custom_call.1} parent=55 // pred_check
          %p562 = pneg %p159
        $region58: #{tpu_custom_call.1} parent=55 // pred_check_branch
          %564 = sbr.rel (%p562) target = $region60
        $region59: #{tpu_custom_call.1} parent=55 // pred_region
          %s565 = sand.u32 %s144, 1
          %s566 = scalar_lea.sflag [#allocation4], %s565
          %s567 = sand.u32 %s144, 1
          %s568 = scalar_lea.vmem [#allocation5], %s567
          %570 = dma.done %s566, 16
        $region60: #{tpu_custom_call.1} parent=55 // pred_fallthru
          _
        // Predicated region
        $region61: #{tpu_custom_call.1} parent=55 // pred_check
          %p571 = pneg %p185
        $region62: #{tpu_custom_call.1} parent=55 // pred_check_branch
          %573 = sbr.rel (%p571) target = $region64
        $region63: #{tpu_custom_call.1} parent=55 // pred_region
          %s574 = sand.u32 %s170, 1
          %s575 = scalar_lea.sflag [#allocation7], %s574
          %s576 = sand.u32 %s170, 1
          %s577 = smul.addr %s576, 16
          %s578 = scalar_lea.vmem [#allocation6], %s577
          %580 = dma.done %s575, 256
        $region64: #{tpu_custom_call.1} parent=55 // pred_fallthru
          _
      $region56: #{tpu_custom_call.1} parent=5 // pred_fallthru
        _
    $region6: #{tpu_custom_call.1} parent=1 // loop_footer
      %s24 = sadd.s32 1, %s20
    $region7: #{tpu_custom_call.1} parent=1 // loop_footer_branch
      %19 = sbr.rel target = $region3
    $region8: #{tpu_custom_call.1} parent=1 // loop_exit
      _
    %581 = vsyncpa [#allocation3], 1
    %s582 = scalar_lea.sflag [#allocation3], 1
    %583 = vsyncpa %s582, 1
    %584 = vsyncpa [#allocation4], 1
    %s585 = scalar_lea.sflag [#allocation4], 1
    %586 = vsyncpa %s585, 1
    %587 = vsyncpa [#allocation7], 1
    %s588 = scalar_lea.sflag [#allocation7], 1
    %589 = vsyncpa %s588, 1

</llo_original>
